<compile_context>
chip_gen: v5e
topology: v5e:2x2
jax: 0.10.0
libtpu: 0.0.40
codegen_flags: <defaults>
</compile_context>

<pallas_src>
import functools

import numpy as np

import jax
import jax.numpy as jnp
from jax.experimental import pallas as pl
from jax.experimental.pallas import tpu as pltpu

_MIB = 2 ** 20


def _round_up(v: int, m: int) -> int:
    return ((v + m - 1) // m) * m


def _sublane(dtype) -> int:
    return max(8, 32 // jnp.dtype(dtype).itemsize)


def _tile_bytes(r: int, c: int, dtype) -> int:
    """VMEM bytes of an (r, c) buffer after (sublane, 128) layout padding."""
    dt = jnp.dtype(dtype)
    return _round_up(max(int(r), 1), _sublane(dt)) * _round_up(max(int(c), 1), 128) * dt.itemsize


def _pick_div(n: int, candidates=(512, 256, 128)) -> int:
    for c in candidates:
        if n % c == 0:
            return c
    return n


@functools.lru_cache(maxsize=None)
def _dct_basis_np(k: int, k_pad: int, transposed: bool) -> np.ndarray:
    """DCT-II cosine basis, zero-padded to (k_pad, k_pad), f32, built on host once.

    transposed=False:  C[u, i]  = cos(pi*(2i+1)*u/(2k))   (left-multiply basis)
    transposed=True :  CT[j, v] = cos(pi*(2j+1)*v/(2k))   (right-multiply basis)
    """
    i = np.arange(k, dtype=np.float64)[:, None]
    u = np.arange(k, dtype=np.float64)[None, :]
    c = np.cos(np.pi * (2.0 * i + 1.0) * u / (2.0 * k))  # c[i, u]
    if not transposed:
        c = c.T                                          # c[u, i]
    out = np.zeros((k_pad, k_pad), dtype=np.float32)
    out[:k, :k] = c.astype(np.float32)
    return out


def _basis(k: int, k_pad: int, transposed: bool, dtype) -> jnp.ndarray:
    return jnp.asarray(_dct_basis_np(k, k_pad, transposed), dtype=dtype)


def _vmem_capacity_bytes() -> int:
    """Physical per-core VMEM; conservative 64 MiB (v7x) if the query fails."""
    try:
        cap = int(getattr(pltpu.get_tpu_info(), "vmem_capacity_bytes", 0))
        if cap > 0:
            return cap
    except Exception:
        pass
    return 64 * _MIB


@functools.lru_cache(maxsize=None)
def _f32_dot_precision():
    """Explicit near-f32 MXU precision if supported by the Mosaic lowering."""
    try:
        def _probe(a_ref, b_ref, o_ref):
            o_ref[...] = jnp.dot(a_ref[...], b_ref[...],
                                 precision=jax.lax.Precision.HIGHEST,
                                 preferred_element_type=jnp.float32)
        out = pl.pallas_call(
            _probe, out_shape=jax.ShapeDtypeStruct((8, 128), jnp.float32),
        )(jnp.ones((8, 128), jnp.float32), jnp.ones((128, 128), jnp.float32))
        jax.block_until_ready(out)
        return jax.lax.Precision.HIGHEST
    except Exception:
        return None  # backend default precision


def _buffered_spec(block_shape, index_map, bufs=2) -> pl.BlockSpec:
    """BlockSpec with explicit buffer count (1 = resident, 3 = deep pipelining)."""
    if bufs != 2:
        buffered = getattr(pl, "Buffered", None)
        if buffered is not None:
            try:
                return pl.BlockSpec(block_shape, index_map, pipeline_mode=buffered(bufs))
            except TypeError:
                pass  # older BlockSpec without pipeline_mode
    return pl.BlockSpec(block_shape, index_map)


# ----------------------------------------------------------------------------
# Fused path: Y[b] = C_m @ X[b] @ C_n^T in a single pallas_call.
# ----------------------------------------------------------------------------

def _dct2_fused_kernel(x_ref, cm_ref, cnt_ref, o_ref, t_ref, *, precision):
    # x_ref: (1, M, N)   cm_ref: (M, M)   cnt_ref: (N, tn)
    # o_ref: (1, M, tn)  t_ref: (M, tn) f32 scratch (row-transform intermediate)
    x = x_ref[0].astype(cnt_ref.dtype)
    t_ref[...] = jnp.dot(x, cnt_ref[...],
                         preferred_element_type=jnp.float32, precision=precision)
    y = jnp.dot(cm_ref[...], t_ref[...].astype(cm_ref.dtype),
                preferred_element_type=jnp.float32, precision=precision)
    o_ref[0] = y.astype(o_ref.dtype)


def _fused_plan(B: int, M: int, N: int, x_dtype):
    basis_dtype = jnp.bfloat16 if jnp.dtype(x_dtype) == jnp.bfloat16 else jnp.float32
    # Column split keeps both v7x TensorCores busy for single-map (B == 1) calls.
    ncol = 2 if (B == 1 and N % 256 == 0) else 1
    tn = N // ncol
    est = (2 * _tile_bytes(M, N, x_dtype)                       # input map (double buf)
           + _tile_bytes(M, M, basis_dtype)                     # resident C_m
           + (1 if ncol == 1 else 2) * _tile_bytes(N, tn, basis_dtype)
           + 2 * _tile_bytes(M, tn, x_dtype)                    # output (double buf)
           + _tile_bytes(M, tn, jnp.float32))                   # f32 intermediate
    return basis_dtype, ncol, tn, est


def _dct2_fused(x3, precision, vmem_cap):
    B, M, N = x3.shape
    basis_dtype, ncol, tn, est = _fused_plan(B, M, N, x3.dtype)
    cm = _basis(M, M, False, basis_dtype)
    cnt = _basis(N, N, True, basis_dtype)

    vmem_limit = int(min(vmem_cap - 8 * _MIB, max(32 * _MIB, est + 4 * _MIB)))
    isz = jnp.dtype(x3.dtype).itemsize
    bsz = jnp.dtype(basis_dtype).itemsize
    cost = pl.CostEstimate(
        flops=int(2 * B * M * N * (M + N)),
        transcendentals=0,
        bytes_accessed=int(2 * B * M * N * isz + (M * M + N * N) * bsz))

    return pl.pallas_call(
        functools.partial(_dct2_fused_kernel, precision=precision),
        out_shape=jax.ShapeDtypeStruct((B, M, N), x3.dtype),
        grid_spec=pltpu.PrefetchScalarGridSpec(
            num_scalar_prefetch=0,
            grid=(B, ncol),
            in_specs=[
                pl.BlockSpec((1, M, N), lambda b, j: (b, 0, 0)),
                _buffered_spec((M, M), lambda b, j: (0, 0), bufs=1),
                _buffered_spec((N, tn), lambda b, j: (0, j),
                               bufs=1 if ncol == 1 else 2),
            ],
            out_specs=pl.BlockSpec((1, M, tn), lambda b, j: (b, 0, j)),
            scratch_shapes=[pltpu.VMEM((M, tn), jnp.float32)],
        ),
        compiler_params=pltpu.CompilerParams(
            dimension_semantics=("parallel", "parallel"),
            vmem_limit_bytes=vmem_limit),
        cost_estimate=cost,
    )(x3, cm, cnt)


# ----------------------------------------------------------------------------
# Fallback path for maps too large to keep resident: two transpose-free passes.
# ----------------------------------------------------------------------------

def _rmul_kernel(x_ref, ct_ref, o_ref, *acc, precision):
    # out = x @ ct; contraction tiled along grid axis 1, full output width resident.
    part = jnp.dot(x_ref[...].astype(ct_ref.dtype), ct_ref[...],
                   preferred_element_type=jnp.float32, precision=precision)
    if not acc:                      # single contraction tile: store directly
        o_ref[...] = part.astype(o_ref.dtype)
        return
    acc_ref, = acc

    @pl.when(pl.program_id(1) == 0)
    def _():
        acc_ref[...] = jnp.zeros_like(acc_ref)

    acc_ref[...] += part

    @pl.when(pl.program_id(1) == pl.num_programs(1) - 1)
    def _():
        o_ref[...] = acc_ref[...].astype(o_ref.dtype)


def _lmul_kernel(cm_ref, z_ref, o_ref, *acc, precision):
    # out[b] = cm @ z[b]; contraction over the sublane axis of z (no transpose).
    part = jnp.dot(cm_ref[...], z_ref[0].astype(cm_ref.dtype),
                   preferred_element_type=jnp.float32, precision=precision)
    if not acc:
        o_ref[0] = part.astype(o_ref.dtype)
        return
    acc_ref, = acc

    @pl.when(pl.program_id(2) == 0)
    def _():
        acc_ref[...] = jnp.zeros_like(acc_ref)

    acc_ref[...] += part

    @pl.when(pl.program_id(2) == pl.num_programs(2) - 1)
    def _():
        o_ref[0] = acc_ref[...].astype(o_ref.dtype)


def _rmul(x2, ct, precision, vmem_cap, out_dtype):
    """out = x2 @ ct.  Rows tiled with masked edges (no padding), full output
    width resident, contraction tiled so x2 streams through HBM exactly once."""
    R, K = x2.shape
    Np = ct.shape[1]
    isz = jnp.dtype(x2.dtype).itemsize
    bsz = jnp.dtype(ct.dtype).itemsize
    osz = jnp.dtype(out_dtype).itemsize

    tk = _pick_div(K)
    nk = K // tk
    budget = max(vmem_cap - 16 * _MIB, 24 * _MIB)

    def est(tm, bufs):
        return (2 * tm * tk * isz + bufs * tk * Np * bsz
                + 2 * tm * Np * osz + (tm * Np * 4 if nk > 1 else 0))

    bufs = 3 if nk > 1 else 1
    tm = next((t for t in (512, 256, 128) if est(t, bufs) <= budget), None)
    if tm is None:
        bufs = 2 if nk > 1 else 1
        tm = next((t for t in (512, 256, 128) if est(t, bufs) <= budget), 128)

    grid = (pl.cdiv(R, tm), nk)
    scratch = [pltpu.VMEM((tm, Np), jnp.float32)] if nk > 1 else []
    vmem_limit = int(min(vmem_cap - 8 * _MIB, max(32 * _MIB, est(tm, bufs) + 8 * _MIB)))
    cost = pl.CostEstimate(
        flops=int(2 * R * K * Np), transcendentals=0,
        bytes_accessed=int(R * K * isz + R * Np * osz + pl.cdiv(R, tm) * K * Np * bsz))

    return pl.pallas_call(
        functools.partial(_rmul_kernel, precision=precision),
        out_shape=jax.ShapeDtypeStruct((R, Np), out_dtype),
        grid_spec=pltpu.PrefetchScalarGridSpec(
            num_scalar_prefetch=0,
            grid=grid,
            in_specs=[
                pl.BlockSpec((tm, tk), lambda i, kk: (i, kk)),
                _buffered_spec((tk, Np), lambda i, kk: (kk, 0), bufs=bufs),
            ],
            out_specs=pl.BlockSpec((tm, Np), lambda i, kk: (i, 0)),
            scratch_shapes=scratch),
        compiler_params=pltpu.CompilerParams(
            dimension_semantics=("parallel", "arbitrary"),
            vmem_limit_bytes=vmem_limit),
        cost_estimate=cost,
    )(x2, ct)


def _lmul(cm, z3, precision, vmem_cap, out_dtype):
    """out[b] = cm @ z3[b] (left multiply; no transpose of the intermediate)."""
    B, Mp, Np = z3.shape
    K = cm.shape[1]
    bsz = jnp.dtype(cm.dtype).itemsize
    zsz = jnp.dtype(z3.dtype).itemsize
    osz = jnp.dtype(out_dtype).itemsize

    tk = _pick_div(K)
    nk = K // tk
    budget = max(vmem_cap - 16 * _MIB, 24 * _MIB)

    def est(tm):
        return (2 * tm * tk * bsz + 2 * tk * Np * zsz
                + 2 * tm * Np * osz + (tm * Np * 4 if nk > 1 else 0))

    tm = next((t for t in (512, 256, 128) if est(t) <= budget), 128)
    grid = (B, pl.cdiv(Mp, tm), nk)
    scratch = [pltpu.VMEM((tm, Np), jnp.float32)] if nk > 1 else []
    vmem_limit = int(min(vmem_cap - 8 * _MIB, max(32 * _MIB, est(tm) + 8 * _MIB)))
    cost = pl.CostEstimate(
        flops=int(2 * B * Mp * K * Np), transcendentals=0,
        bytes_accessed=int(B * (pl.cdiv(Mp, tm) * K * Np * zsz + Mp * Np * osz)
                           + Mp * K * bsz))

    return pl.pallas_call(
        functools.partial(_lmul_kernel, precision=precision),
        out_shape=jax.ShapeDtypeStruct((B, Mp, Np), out_dtype),
        grid_spec=pltpu.PrefetchScalarGridSpec(
            num_scalar_prefetch=0,
            grid=grid,
            in_specs=[
                pl.BlockSpec((tm, tk), lambda b, i, kk: (i, kk)),
                pl.BlockSpec((1, tk, Np), lambda b, i, kk: (b, kk, 0)),
            ],
            out_specs=pl.BlockSpec((1, tm, Np), lambda b, i, kk: (b, i, 0)),
            scratch_shapes=scratch),
        compiler_params=pltpu.CompilerParams(
            dimension_semantics=("parallel", "parallel", "arbitrary"),
            vmem_limit_bytes=vmem_limit),
        cost_estimate=cost,
    )(cm, z3)


def _dct2_two_pass(x3, precision, vmem_cap):
    B, M, N = x3.shape
    basis_dtype = jnp.bfloat16 if jnp.dtype(x3.dtype) == jnp.bfloat16 else jnp.float32
    Mp, Np = _round_up(M, 128), _round_up(N, 128)

    xp = x3
    if (Mp, Np) != (M, N):
        # Single lane-alignment pad (only when M/N aren't already 128 multiples).
        xp = jnp.pad(x3, ((0, 0), (0, Mp - M), (0, Np - N)))

    # Pass 1 (row transform): Z = X @ C_n^T — intermediate carried in f32.
    cnt = _basis(N, Np, True, basis_dtype)
    z = _rmul(xp.reshape(B * Mp, Np), cnt, precision, vmem_cap, jnp.float32)
    z = z.reshape(B, Mp, Np)

    # Pass 2 (column transform): Y = C_m @ Z.
    cm = _basis(M, Mp, False, basis_dtype)
    y = _lmul(cm, z, precision, vmem_cap, x3.dtype)

    if (Mp, Np) != (M, N):
        y = y[:, :M, :N]
    return y


# ----------------------------------------------------------------------------
# Public entry point.
# ----------------------------------------------------------------------------

@functools.partial(jax.jit, static_argnums=(1, 2))
def _dct2_impl(x, precision, vmem_cap):
    shape = x.shape
    M, N = shape[-2], shape[-1]
    x3 = x.reshape((-1, M, N))
    B = x3.shape[0]

    _, _, _, est = _fused_plan(B, M, N, x.dtype)
    if est <= vmem_cap - 16 * _MIB:
        y3 = _dct2_fused(x3, precision, vmem_cap)
    else:
        y3 = _dct2_two_pass(x3, precision, vmem_cap)
    return y3.reshape(shape)


def dct2(x):
    """2D unnormalized DCT-II along the last two axes (DREAMPlace DCT2.forward)."""
    precision = None if jnp.dtype(x.dtype) == jnp.bfloat16 else _f32_dot_precision()
    return _dct2_impl(x, precision, _vmem_capacity_bytes())


def _dct2_reference(x, precision=None):
    """Pure-JAX reference of the same formula (correctness check)."""
    m, n = x.shape[-2], x.shape[-1]
    c0 = jnp.asarray(_dct_basis_np(m, m, False))  # c0[u, i]
    c1 = jnp.asarray(_dct_basis_np(n, n, True))   # c1[j, v]
    y = jnp.einsum("ui,...ij,jv->...uv", c0, x.astype(jnp.float32), c1,
                   precision=precision)
    return y.astype(x.dtype)


if __name__ == "__main__":
    key = jax.random.PRNGKey(0)
    # Batch dims + 2D map on the last two axes, consistent with the module.
    x = jax.random.normal(key, (2, 4, 16, 16), dtype=jnp.float32)

    y = jax.block_until_ready(dct2(x))

    prec = None if jnp.dtype(x.dtype) == jnp.bfloat16 else _f32_dot_precision()
    y_ref = _dct2_reference(x, precision=prec)

    assert y.shape == x.shape and y.dtype == x.dtype
    assert jnp.allclose(y, y_ref, atol=2e-3, rtol=2e-3), "DCT2 kernel mismatch vs reference"

    print("KERNEL_OK")
</pallas_src>

<mosaic_0001>
module attributes {stable_mosaic.version = 11 : i64} {
  func.func @_probe(%arg0: memref<8x128xf32, #tpu.memory_space<vmem>>, %arg1: memref<128x128xf32, #tpu.memory_space<vmem>>, %arg2: memref<8x128xf32, #tpu.memory_space<vmem>>) attributes {dimension_semantics = [], scalar_prefetch = 0 : i64, scratch_operands = 0 : i64, tpu.core_type = #tpu.core_type<tc>} {
    %c0 = arith.constant 0 : index
    %c0_0 = arith.constant 0 : index
    %0 = vector.load %arg0[%c0, %c0_0] : memref<8x128xf32, #tpu.memory_space<vmem>>, vector<8x128xf32>
    %c0_1 = arith.constant 0 : index
    %c0_2 = arith.constant 0 : index
    %1 = vector.load %arg1[%c0_1, %c0_2] : memref<128x128xf32, #tpu.memory_space<vmem>>, vector<128x128xf32>
    %cst = arith.constant dense<0.000000e+00> : vector<8x128xf32>
    %2 = tpu.matmul %0, %1, %cst {dimension_numbers = #tpu.dot_dimension_numbers<[1], [0], [0], [1], [0, 0, 1, 1], [], []>, precision = #tpu.contract_precision<fp32>} : vector<8x128xf32>, vector<128x128xf32>, vector<8x128xf32> -> vector<8x128xf32>
    %c0_3 = arith.constant 0 : index
    %c0_4 = arith.constant 0 : index
    %3 = vector.load %arg2[%c0_3, %c0_4] : memref<8x128xf32, #tpu.memory_space<vmem>>, vector<8x128xf32>
    tpu.vector_store %arg2[%c0_3, %c0_4], %2 {strides = array<i32>} : memref<8x128xf32, #tpu.memory_space<vmem>>, vector<8x128xf32>,
    return
  }
}

module attributes {stable_mosaic.version = 11 : i64} {
  func.func @_dct2_fused_kernel(%arg0: i32, %arg1: i32, %arg2: memref<1x16x16xf32, #tpu.memory_space<vmem>>, %arg3: memref<16x16xf32, #tpu.memory_space<vmem>>, %arg4: memref<16x16xf32, #tpu.memory_space<vmem>>, %arg5: memref<1x16x16xf32, #tpu.memory_space<vmem>>, %arg6: memref<16x16xf32, #tpu.memory_space<vmem>>) attributes {dimension_semantics = [#tpu.dimension_semantics<parallel>, #tpu.dimension_semantics<parallel>], iteration_bounds = array<i64: 8, 1>, scalar_prefetch = 0 : i64, scratch_operands = 1 : i64, tpu.core_type = #tpu.core_type<tc>, window_params = [{transform_indices = @transform_0, window_bounds = array<i64: 1, 16, 16>}, {pipeline_mode = #tpu.pipeline_mode<synchronous>, transform_indices = @transform_1, window_bounds = array<i64: 16, 16>}, {pipeline_mode = #tpu.pipeline_mode<synchronous>, transform_indices = @transform_2, window_bounds = array<i64: 16, 16>}, {transform_indices = @transform_3, window_bounds = array<i64: 1, 16, 16>}]} {
    %c0 = arith.constant 0 : index
    %c0_0 = arith.constant 0 : index
    %c0_1 = arith.constant 0 : index
    %0 = vector.load %arg2[%c0, %c0_0, %c0_1] : memref<1x16x16xf32, #tpu.memory_space<vmem>>, vector<1x16x16xf32>
    %1 = vector.shape_cast %0 : vector<1x16x16xf32> to vector<16x16xf32>
    %c0_2 = arith.constant 0 : index
    %c0_3 = arith.constant 0 : index
    %2 = vector.load %arg4[%c0_2, %c0_3] : memref<16x16xf32, #tpu.memory_space<vmem>>, vector<16x16xf32>
    %cst = arith.constant dense<0.000000e+00> : vector<16x16xf32>
    %3 = tpu.matmul %1, %2, %cst {dimension_numbers = #tpu.dot_dimension_numbers<[1], [0], [0], [1], [0, 0, 1, 1], [], []>} : vector<16x16xf32>, vector<16x16xf32>, vector<16x16xf32> -> vector<16x16xf32>
    %c0_4 = arith.constant 0 : index
    %c0_5 = arith.constant 0 : index
    %4 = vector.load %arg6[%c0_4, %c0_5] : memref<16x16xf32, #tpu.memory_space<vmem>>, vector<16x16xf32>
    tpu.vector_store %arg6[%c0_4, %c0_5], %3 {strides = array<i32>} : memref<16x16xf32, #tpu.memory_space<vmem>>, vector<16x16xf32>,
    %c0_6 = arith.constant 0 : index
    %c0_7 = arith.constant 0 : index
    %5 = vector.load %arg3[%c0_6, %c0_7] : memref<16x16xf32, #tpu.memory_space<vmem>>, vector<16x16xf32>
    %c0_8 = arith.constant 0 : index
    %c0_9 = arith.constant 0 : index
    %6 = vector.load %arg6[%c0_8, %c0_9] : memref<16x16xf32, #tpu.memory_space<vmem>>, vector<16x16xf32>
    %cst_10 = arith.constant dense<0.000000e+00> : vector<16x16xf32>
    %7 = tpu.matmul %5, %6, %cst_10 {dimension_numbers = #tpu.dot_dimension_numbers<[1], [0], [0], [1], [0, 0, 1, 1], [], []>} : vector<16x16xf32>, vector<16x16xf32>, vector<16x16xf32> -> vector<16x16xf32>
    %c0_11 = arith.constant 0 : index
    %c0_12 = arith.constant 0 : index
    %c0_13 = arith.constant 0 : index
    %8 = vector.load %arg5[%c0_11, %c0_12, %c0_13] : memref<1x16x16xf32, #tpu.memory_space<vmem>>, vector<1x16x16xf32>
    %9 = vector.shape_cast %8 : vector<1x16x16xf32> to vector<16x16xf32>
    %10 = vector.shape_cast %7 : vector<16x16xf32> to vector<1x16x16xf32>
    tpu.vector_store %arg5[%c0_11, %c0_12, %c0_13], %10 {strides = array<i32>} : memref<1x16x16xf32, #tpu.memory_space<vmem>>, vector<1x16x16xf32>,
    return
  }
  func.func @transform_0(%arg0: i32, %arg1: i32) -> (i32, i32, i32) {
    %c0_i32 = arith.constant 0 : i32
    %c0_i32_0 = arith.constant 0 : i32
    %c0_i32_1 = arith.constant 0 : i32
    return %arg0, %c0_i32, %c0_i32_0 : i32, i32, i32
  }
  func.func @transform_1(%arg0: i32, %arg1: i32) -> (i32, i32) {
    %c0_i32 = arith.constant 0 : i32
    %c0_i32_0 = arith.constant 0 : i32
    %c0_i32_1 = arith.constant 0 : i32
    return %c0_i32, %c0_i32_0 : i32, i32
  }
  func.func @transform_2(%arg0: i32, %arg1: i32) -> (i32, i32) {
    %c0_i32 = arith.constant 0 : i32
    %c0_i32_0 = arith.constant 0 : i32
    return %c0_i32, %arg1 : i32, i32
  }
  func.func @transform_3(%arg0: i32, %arg1: i32) -> (i32, i32, i32) {
    %c0_i32 = arith.constant 0 : i32
    %c0_i32_0 = arith.constant 0 : i32
    return %arg0, %c0_i32, %arg1 : i32, i32, i32
  }
}

</mosaic_0001>

<llo_original>
// kernel: tpu_custom_call.1
$region0: #{tpu_custom_call.1}
  #allocation0 [shape = 'u32[]', space=smem, size = 0x4, offset = 0x4, fixed_abs, tag = 'smem constant byte address 0x4 - core index']
  #allocation1 [shape = 'u32[72,128]{1,0:T(1,128)}', space=vmem, size = 0x9000, scoped, tag = 'internal scratch']
  %s0 = inlined_call_operand.hbm [shape: f32[8,128], index: 0, kind: input, shape index: {}]
  %s1 = inlined_call_operand.hbm [shape: f32[128,128], index: 1, kind: input, shape index: {}]
  %s2 = inlined_call_operand.hbm [shape: f32[8,128], index: 2, kind: output, shape index: {}]
  %s3 = sld [smem:[#allocation0]]
  $region26: #{tpu_custom_call.1} parent=0
    _
  %s5 = ssub.s32 1, %s3
  %s6 = scalar_select 0, %s5, %s3
  $region1: #{tpu_custom_call.1} parent=0
    #allocation2 [shape = 'u8[4096]{0}', space=vmem, size = 0x1000, scoped, tag = 'input window, operand 0, single buffered']
    #allocation3 [shape = 's32[1]{0}', space=sflag, size = 0x4, scoped, tag = 'scoped memory for tpu_custom_call.1']
    #allocation4 [shape = 's32[1]{0}', space=sflag, size = 0x4, scoped, tag = 'scoped memory for tpu_custom_call.1']
    #allocation5 [shape = 'u8[65536]{0}', space=vmem, size = 0x10000, scoped, tag = 'input window, operand 1, single buffered']
    #allocation6 [shape = 's32[1]{0}', space=sflag, size = 0x4, scoped, tag = 'scoped memory for tpu_custom_call.1']
    #allocation7 [shape = 'u8[4096]{0}', space=vmem, size = 0x1000, scoped, tag = 'output window, operand 0, single buffered']
    %7 = vsyncpa [#allocation3], 0
    %8 = vsyncpa [#allocation6], 0
    %9 = vsyncpa [#allocation4], 0
    // Predicated region
    $region2: #{tpu_custom_call.1} parent=1 // pred_check
      _
    $region3: #{tpu_custom_call.1} parent=1 // pred_check_branch
      %11 = sbr.rel (0) target = $region5
    $region4: #{tpu_custom_call.1} parent=1 // pred_region
      %13 = vsyncadd [#allocation3], 0
      %s15 = sshll.u32 %s0, 4
      %s16 = int_to_ptr.hbm [resolvable:$true] %s15
      %s17 = sshll.u32 [#allocation2], 4
      %s18 = int_to_ptr.vmem [resolvable:$true] %s17
      %20 = dma.hbm_to_vmem [thread:$0]  %s16, 128, %s18, [#allocation3]
    $region5: #{tpu_custom_call.1} parent=1 // pred_fallthru
      _
    // Predicated region
    $region6: #{tpu_custom_call.1} parent=1 // pred_check
      _
    $region7: #{tpu_custom_call.1} parent=1 // pred_check_branch
      %22 = sbr.rel (0) target = $region9
    $region8: #{tpu_custom_call.1} parent=1 // pred_region
      %24 = vsyncadd [#allocation6], 0
      %s25 = sshll.u32 %s1, 4
      %s26 = int_to_ptr.hbm [resolvable:$true] %s25
      %s27 = sshll.u32 [#allocation5], 4
      %s28 = int_to_ptr.vmem [resolvable:$true] %s27
      %33 = dma.hbm_to_vmem [thread:$0]  %s26, 2048, %s28, [#allocation6], 128, 128, 8
    $region9: #{tpu_custom_call.1} parent=1 // pred_fallthru
      _
    // Predicated region
    $region10: #{tpu_custom_call.1} parent=1 // pred_check
      _
    $region11: #{tpu_custom_call.1} parent=1 // pred_check_branch
      %35 = sbr.rel (0) target = $region13
    $region12: #{tpu_custom_call.1} parent=1 // pred_region
      %37 = dma.done [#allocation3], 128
    $region13: #{tpu_custom_call.1} parent=1 // pred_fallthru
      _
    // Predicated region
    $region14: #{tpu_custom_call.1} parent=1 // pred_check
      _
    $region15: #{tpu_custom_call.1} parent=1 // pred_check_branch
      %39 = sbr.rel (0) target = $region17
    $region16: #{tpu_custom_call.1} parent=1 // pred_region
      %41 = dma.done [#allocation6], 2048
    $region17: #{tpu_custom_call.1} parent=1 // pred_fallthru
      _
    %v42 = vld [vmem:[#allocation2] sm:$0xff]
    %v43 = vld [vmem:[#allocation5] sm:$0xff]
    %v44 = vld [vmem:[#allocation5 + $0x8] sm:$0xff]
    %v45 = vld [vmem:[#allocation5 + $0x10] sm:$0xff]
    %v46 = vld [vmem:[#allocation5 + $0x18] sm:$0xff]
    %v47 = vld [vmem:[#allocation5 + $0x20] sm:$0xff]
    %v48 = vld [vmem:[#allocation5 + $0x28] sm:$0xff]
    %v49 = vld [vmem:[#allocation5 + $0x30] sm:$0xff]
    %v50 = vld [vmem:[#allocation5 + $0x38] sm:$0xff]
    %v51 = vld [vmem:[#allocation5 + $0x40] sm:$0xff]
    %v52 = vld [vmem:[#allocation5 + $0x48] sm:$0xff]
    %v53 = vld [vmem:[#allocation5 + $0x50] sm:$0xff]
    %v54 = vld [vmem:[#allocation5 + $0x58] sm:$0xff]
    %v55 = vld [vmem:[#allocation5 + $0x60] sm:$0xff]
    %v56 = vld [vmem:[#allocation5 + $0x68] sm:$0xff]
    %v57 = vld [vmem:[#allocation5 + $0x70] sm:$0xff]
    %v58 = vld [vmem:[#allocation5 + $0x78] sm:$0xff]
    %v59 = vand.u32 %v58, 4294901760
    %60 = vmatpush.msra.mxu0 %v59
    %v61 = vand.u32 %v57, 4294901760
    %62 = vmatpush.msra.mxu0 %v61
    %v63 = vand.u32 %v56, 4294901760
    %64 = vmatpush.msra.mxu0 %v63
    %v65 = vand.u32 %v55, 4294901760
    %66 = vmatpush.msra.mxu0 %v65
    %v67 = vand.u32 %v54, 4294901760
    %68 = vmatpush.msra.mxu0 %v67
    %v69 = vand.u32 %v53, 4294901760
    %70 = vmatpush.msra.mxu0 %v69
    %v71 = vand.u32 %v52, 4294901760
    %72 = vmatpush.msra.mxu0 %v71
    %v73 = vand.u32 %v51, 4294901760
    %74 = vmatpush.msra.mxu0 %v73
    %v75 = vand.u32 %v50, 4294901760
    %76 = vmatpush.msra.mxu0 %v75
    %v77 = vand.u32 %v49, 4294901760
    %78 = vmatpush.msra.mxu0 %v77
    %v79 = vand.u32 %v48, 4294901760
    %80 = vmatpush.msra.mxu0 %v79
    %v81 = vand.u32 %v47, 4294901760
    %82 = vmatpush.msra.mxu0 %v81
    %v83 = vand.u32 %v46, 4294901760
    %84 = vmatpush.msra.mxu0 %v83
    %v85 = vand.u32 %v45, 4294901760
    %86 = vmatpush.msra.mxu0 %v85
    %v87 = vand.u32 %v44, 4294901760
    %88 = vmatpush.msra.mxu0 %v87
    %v89 = vand.u32 %v43, 4294901760
    %90 = vmatpush.msra.mxu0 %v89
    %v91 = vand.u32 %v42, 4294901760
    %v92 = vsub.f32 %v42, %v91
    %v93 = vand.u32 %v92, 4294901760
    %v94 = vsub.f32 %v92, %v93
    %v95 = vand.u32 %v94, 4294901760
    %96 = vmatmul.f32.gmra.mxu0 %v95
    %v97 = vpop.f32.mrf.mxu0
    %v98 = vadd.f32 0.0, %v97
    %99 = vdwg.mxu0
    %v100 = vand.u32 %v58, 4294901760
    %v101 = vsub.f32 %v58, %v100
    %v102 = vand.u32 %v101, 4294901760
    %v103 = vsub.f32 %v101, %v102
    %v104 = vand.u32 %v103, 4294901760
    %105 = vmatpush.msra.mxu0 %v104
    %v106 = vand.u32 %v57, 4294901760
    %v107 = vsub.f32 %v57, %v106
    %v108 = vand.u32 %v107, 4294901760
    %v109 = vsub.f32 %v107, %v108
    %v110 = vand.u32 %v109, 4294901760
    %111 = vmatpush.msra.mxu0 %v110
    %v112 = vand.u32 %v56, 4294901760
    %v113 = vsub.f32 %v56, %v112
    %v114 = vand.u32 %v113, 4294901760
    %v115 = vsub.f32 %v113, %v114
    %v116 = vand.u32 %v115, 4294901760
    %117 = vmatpush.msra.mxu0 %v116
    %v118 = vand.u32 %v55, 4294901760
    %v119 = vsub.f32 %v55, %v118
    %v120 = vand.u32 %v119, 4294901760
    %v121 = vsub.f32 %v119, %v120
    %v122 = vand.u32 %v121, 4294901760
    %123 = vmatpush.msra.mxu0 %v122
    %v124 = vand.u32 %v54, 4294901760
    %v125 = vsub.f32 %v54, %v124
    %v126 = vand.u32 %v125, 4294901760
    %v127 = vsub.f32 %v125, %v126
    %v128 = vand.u32 %v127, 4294901760
    %129 = vmatpush.msra.mxu0 %v128
    %v130 = vand.u32 %v53, 4294901760
    %v131 = vsub.f32 %v53, %v130
    %v132 = vand.u32 %v131, 4294901760
    %v133 = vsub.f32 %v131, %v132
    %v134 = vand.u32 %v133, 4294901760
    %135 = vmatpush.msra.mxu0 %v134
    %v136 = vand.u32 %v52, 4294901760
    %v137 = vsub.f32 %v52, %v136
    %v138 = vand.u32 %v137, 4294901760
    %v139 = vsub.f32 %v137, %v138
    %v140 = vand.u32 %v139, 4294901760
    %141 = vmatpush.msra.mxu0 %v140
    %v142 = vand.u32 %v51, 4294901760
    %v143 = vsub.f32 %v51, %v142
    %v144 = vand.u32 %v143, 4294901760
    %v145 = vsub.f32 %v143, %v144
    %v146 = vand.u32 %v145, 4294901760
    %147 = vmatpush.msra.mxu0 %v146
    %v148 = vand.u32 %v50, 4294901760
    %v149 = vsub.f32 %v50, %v148
    %v150 = vand.u32 %v149, 4294901760
    %v151 = vsub.f32 %v149, %v150
    %v152 = vand.u32 %v151, 4294901760
    %153 = vmatpush.msra.mxu0 %v152
    %v154 = vand.u32 %v49, 4294901760
    %v155 = vsub.f32 %v49, %v154
    %v156 = vand.u32 %v155, 4294901760
    %v157 = vsub.f32 %v155, %v156
    %v158 = vand.u32 %v157, 4294901760
    %159 = vmatpush.msra.mxu0 %v158
    %v160 = vand.u32 %v48, 4294901760
    %v161 = vsub.f32 %v48, %v160
    %v162 = vand.u32 %v161, 4294901760
    %v163 = vsub.f32 %v161, %v162
    %v164 = vand.u32 %v163, 4294901760
    %165 = vmatpush.msra.mxu0 %v164
    %v166 = vand.u32 %v47, 4294901760
    %v167 = vsub.f32 %v47, %v166
    %v168 = vand.u32 %v167, 4294901760
    %v169 = vsub.f32 %v167, %v168
    %v170 = vand.u32 %v169, 4294901760
    %171 = vmatpush.msra.mxu0 %v170
    %v172 = vand.u32 %v46, 4294901760
    %v173 = vsub.f32 %v46, %v172
    %v174 = vand.u32 %v173, 4294901760
    %v175 = vsub.f32 %v173, %v174
    %v176 = vand.u32 %v175, 4294901760
    %177 = vmatpush.msra.mxu0 %v176
    %v178 = vand.u32 %v45, 4294901760
    %v179 = vsub.f32 %v45, %v178
    %v180 = vand.u32 %v179, 4294901760
    %v181 = vsub.f32 %v179, %v180
    %v182 = vand.u32 %v181, 4294901760
    %183 = vmatpush.msra.mxu0 %v182
    %v184 = vand.u32 %v44, 4294901760
    %v185 = vsub.f32 %v44, %v184
    %v186 = vand.u32 %v185, 4294901760
    %v187 = vsub.f32 %v185, %v186
    %v188 = vand.u32 %v187, 4294901760
    %189 = vmatpush.msra.mxu0 %v188
    %v190 = vand.u32 %v43, 4294901760
    %v191 = vsub.f32 %v43, %v190
    %v192 = vand.u32 %v191, 4294901760
    %v193 = vsub.f32 %v191, %v192
    %v194 = vand.u32 %v193, 4294901760
    %195 = vmatpush.msra.mxu0 %v194
    %v196 = vand.u32 %v42, 4294901760
    %197 = vmatmul.f32.gmra.mxu0 %v196
    %v198 = vpop.f32.mrf.mxu0
    %v199 = vadd.f32 %v98, %v198
    %200 = vdwg.mxu0
    %v201 = vand.u32 %v58, 4294901760
    %v202 = vsub.f32 %v58, %v201
    %203 = vmatpush.msra.mxu0 %v202
    %v204 = vand.u32 %v57, 4294901760
    %v205 = vsub.f32 %v57, %v204
    %206 = vmatpush.msra.mxu0 %v205
    %v207 = vand.u32 %v56, 4294901760
    %v208 = vsub.f32 %v56, %v207
    %209 = vmatpush.msra.mxu0 %v208
    %v210 = vand.u32 %v55, 4294901760
    %v211 = vsub.f32 %v55, %v210
    %212 = vmatpush.msra.mxu0 %v211
    %v213 = vand.u32 %v54, 4294901760
    %v214 = vsub.f32 %v54, %v213
    %215 = vmatpush.msra.mxu0 %v214
    %v216 = vand.u32 %v53, 4294901760
    %v217 = vsub.f32 %v53, %v216
    %218 = vmatpush.msra.mxu0 %v217
    %v219 = vand.u32 %v52, 4294901760
    %v220 = vsub.f32 %v52, %v219
    %221 = vmatpush.msra.mxu0 %v220
    %v222 = vand.u32 %v51, 4294901760
    %v223 = vsub.f32 %v51, %v222
    %224 = vmatpush.msra.mxu0 %v223
    %v225 = vand.u32 %v50, 4294901760
    %v226 = vsub.f32 %v50, %v225
    %227 = vmatpush.msra.mxu0 %v226
    %v228 = vand.u32 %v49, 4294901760
    %v229 = vsub.f32 %v49, %v228
    %230 = vmatpush.msra.mxu0 %v229
    %v231 = vand.u32 %v48, 4294901760
    %v232 = vsub.f32 %v48, %v231
    %233 = vmatpush.msra.mxu0 %v232
    %v234 = vand.u32 %v47, 4294901760
    %v235 = vsub.f32 %v47, %v234
    %236 = vmatpush.msra.mxu0 %v235
    %v237 = vand.u32 %v46, 4294901760
    %v238 = vsub.f32 %v46, %v237
    %239 = vmatpush.msra.mxu0 %v238
    %v240 = vand.u32 %v45, 4294901760
    %v241 = vsub.f32 %v45, %v240
    %242 = vmatpush.msra.mxu0 %v241
    %v243 = vand.u32 %v44, 4294901760
    %v244 = vsub.f32 %v44, %v243
    %245 = vmatpush.msra.mxu0 %v244
    %v246 = vand.u32 %v43, 4294901760
    %v247 = vsub.f32 %v43, %v246
    %248 = vmatpush.msra.mxu0 %v247
    %v249 = vand.u32 %v42, 4294901760
    %v250 = vsub.f32 %v42, %v249
    %251 = vmatmul.f32.gmra.mxu0 %v250
    %v252 = vpop.f32.mrf.mxu0
    %v253 = vadd.f32 %v199, %v252
    %254 = vdwg.mxu0
    %v255 = vand.u32 %v58, 4294901760
    %256 = vmatpush.msra.mxu0 %v255
    %v257 = vand.u32 %v57, 4294901760
    %258 = vmatpush.msra.mxu0 %v257
    %v259 = vand.u32 %v56, 4294901760
    %260 = vmatpush.msra.mxu0 %v259
    %v261 = vand.u32 %v55, 4294901760
    %262 = vmatpush.msra.mxu0 %v261
    %v263 = vand.u32 %v54, 4294901760
    %264 = vmatpush.msra.mxu0 %v263
    %v265 = vand.u32 %v53, 4294901760
    %266 = vmatpush.msra.mxu0 %v265
    %v267 = vand.u32 %v52, 4294901760
    %268 = vmatpush.msra.mxu0 %v267
    %v269 = vand.u32 %v51, 4294901760
    %270 = vmatpush.msra.mxu0 %v269
    %v271 = vand.u32 %v50, 4294901760
    %272 = vmatpush.msra.mxu0 %v271
    %v273 = vand.u32 %v49, 4294901760
    %274 = vmatpush.msra.mxu0 %v273
    %v275 = vand.u32 %v48, 4294901760
    %276 = vmatpush.msra.mxu0 %v275
    %v277 = vand.u32 %v47, 4294901760
    %278 = vmatpush.msra.mxu0 %v277
    %v279 = vand.u32 %v46, 4294901760
    %280 = vmatpush.msra.mxu0 %v279
    %v281 = vand.u32 %v45, 4294901760
    %282 = vmatpush.msra.mxu0 %v281
    %v283 = vand.u32 %v44, 4294901760
    %284 = vmatpush.msra.mxu0 %v283
    %v285 = vand.u32 %v43, 4294901760
    %286 = vmatpush.msra.mxu0 %v285
    %v287 = vand.u32 %v42, 4294901760
    %v288 = vsub.f32 %v42, %v287
    %v289 = vand.u32 %v288, 4294901760
    %290 = vmatmul.f32.gmra.mxu0 %v289
    %v291 = vpop.f32.mrf.mxu0
    %v292 = vadd.f32 %v253, %v291
    %293 = vdwg.mxu0
    %v294 = vand.u32 %v58, 4294901760
    %v295 = vsub.f32 %v58, %v294
    %v296 = vand.u32 %v295, 4294901760
    %297 = vmatpush.msra.mxu0 %v296
    %v298 = vand.u32 %v57, 4294901760
    %v299 = vsub.f32 %v57, %v298
    %v300 = vand.u32 %v299, 4294901760
    %301 = vmatpush.msra.mxu0 %v300
    %v302 = vand.u32 %v56, 4294901760
    %v303 = vsub.f32 %v56, %v302
    %v304 = vand.u32 %v303, 4294901760
    %305 = vmatpush.msra.mxu0 %v304
    %v306 = vand.u32 %v55, 4294901760
    %v307 = vsub.f32 %v55, %v306
    %v308 = vand.u32 %v307, 4294901760
    %309 = vmatpush.msra.mxu0 %v308
    %v310 = vand.u32 %v54, 4294901760
    %v311 = vsub.f32 %v54, %v310
    %v312 = vand.u32 %v311, 4294901760
    %313 = vmatpush.msra.mxu0 %v312
    %v314 = vand.u32 %v53, 4294901760
    %v315 = vsub.f32 %v53, %v314
    %v316 = vand.u32 %v315, 4294901760
    %317 = vmatpush.msra.mxu0 %v316
    %v318 = vand.u32 %v52, 4294901760
    %v319 = vsub.f32 %v52, %v318
    %v320 = vand.u32 %v319, 4294901760
    %321 = vmatpush.msra.mxu0 %v320
    %v322 = vand.u32 %v51, 4294901760
    %v323 = vsub.f32 %v51, %v322
    %v324 = vand.u32 %v323, 4294901760
    %325 = vmatpush.msra.mxu0 %v324
    %v326 = vand.u32 %v50, 4294901760
    %v327 = vsub.f32 %v50, %v326
    %v328 = vand.u32 %v327, 4294901760
    %329 = vmatpush.msra.mxu0 %v328
    %v330 = vand.u32 %v49, 4294901760
    %v331 = vsub.f32 %v49, %v330
    %v332 = vand.u32 %v331, 4294901760
    %333 = vmatpush.msra.mxu0 %v332
    %v334 = vand.u32 %v48, 4294901760
    %v335 = vsub.f32 %v48, %v334
    %v336 = vand.u32 %v335, 4294901760
    %337 = vmatpush.msra.mxu0 %v336
    %v338 = vand.u32 %v47, 4294901760
    %v339 = vsub.f32 %v47, %v338
    %v340 = vand.u32 %v339, 4294901760
    %341 = vmatpush.msra.mxu0 %v340
    %v342 = vand.u32 %v46, 4294901760
    %v343 = vsub.f32 %v46, %v342
    %v344 = vand.u32 %v343, 4294901760
    %345 = vmatpush.msra.mxu0 %v344
    %v346 = vand.u32 %v45, 4294901760
    %v347 = vsub.f32 %v45, %v346
    %v348 = vand.u32 %v347, 4294901760
    %349 = vmatpush.msra.mxu0 %v348
    %v350 = vand.u32 %v44, 4294901760
    %v351 = vsub.f32 %v44, %v350
    %v352 = vand.u32 %v351, 4294901760
    %353 = vmatpush.msra.mxu0 %v352
    %v354 = vand.u32 %v43, 4294901760
    %v355 = vsub.f32 %v43, %v354
    %v356 = vand.u32 %v355, 4294901760
    %357 = vmatpush.msra.mxu0 %v356
    %v358 = vand.u32 %v42, 4294901760
    %359 = vmatmul.f32.gmra.mxu0 %v358
    %v360 = vpop.f32.mrf.mxu0
    %v361 = vadd.f32 %v292, %v360
    %362 = vdwg.mxu0
    %v363 = vand.u32 %v58, 4294901760
    %364 = vmatpush.msra.mxu0 %v363
    %v365 = vand.u32 %v57, 4294901760
    %366 = vmatpush.msra.mxu0 %v365
    %v367 = vand.u32 %v56, 4294901760
    %368 = vmatpush.msra.mxu0 %v367
    %v369 = vand.u32 %v55, 4294901760
    %370 = vmatpush.msra.mxu0 %v369
    %v371 = vand.u32 %v54, 4294901760
    %372 = vmatpush.msra.mxu0 %v371
    %v373 = vand.u32 %v53, 4294901760
    %374 = vmatpush.msra.mxu0 %v373
    %v375 = vand.u32 %v52, 4294901760
    %376 = vmatpush.msra.mxu0 %v375
    %v377 = vand.u32 %v51, 4294901760
    %378 = vmatpush.msra.mxu0 %v377
    %v379 = vand.u32 %v50, 4294901760
    %380 = vmatpush.msra.mxu0 %v379
    %v381 = vand.u32 %v49, 4294901760
    %382 = vmatpush.msra.mxu0 %v381
    %v383 = vand.u32 %v48, 4294901760
    %384 = vmatpush.msra.mxu0 %v383
    %v385 = vand.u32 %v47, 4294901760
    %386 = vmatpush.msra.mxu0 %v385
    %v387 = vand.u32 %v46, 4294901760
    %388 = vmatpush.msra.mxu0 %v387
    %v389 = vand.u32 %v45, 4294901760
    %390 = vmatpush.msra.mxu0 %v389
    %v391 = vand.u32 %v44, 4294901760
    %392 = vmatpush.msra.mxu0 %v391
    %v393 = vand.u32 %v43, 4294901760
    %394 = vmatpush.msra.mxu0 %v393
    %v395 = vand.u32 %v42, 4294901760
    %396 = vmatmul.f32.gmra.mxu0 %v395
    %v397 = vpop.f32.mrf.mxu0
    %v398 = vadd.f32 %v361, %v397
    %399 = vdwg.mxu0
    %400 = vst [vmem:[#allocation7] sm:$0xff] %v398
    // Predicated region
    $region18: #{tpu_custom_call.1} parent=1 // pred_check
      _
    $region19: #{tpu_custom_call.1} parent=1 // pred_check_branch
      %402 = sbr.rel (0) target = $region21
    $region20: #{tpu_custom_call.1} parent=1 // pred_region
      %404 = vsyncadd [#allocation4], 0
      %s406 = sshll.u32 [#allocation7], 4
      %s407 = int_to_ptr.vmem [resolvable:$true] %s406
      %s408 = sshll.u32 %s2, 4
      %s409 = int_to_ptr.hbm [resolvable:$true] %s408
      %411 = dma.vmem_to_hbm [thread:$0]  %s407, 128, %s409, [#allocation4]
    $region21: #{tpu_custom_call.1} parent=1 // pred_fallthru
      _
    // Predicated region
    $region22: #{tpu_custom_call.1} parent=1 // pred_check
      _
    $region23: #{tpu_custom_call.1} parent=1 // pred_check_branch
      %413 = sbr.rel (0) target = $region25
    $region24: #{tpu_custom_call.1} parent=1 // pred_region
      %415 = dma.done [#allocation4], 128
    $region25: #{tpu_custom_call.1} parent=1 // pred_fallthru
      _
    %416 = vsyncpa [#allocation3], 1
    %417 = vsyncpa [#allocation6], 1
    %418 = vsyncpa [#allocation4], 1

// kernel: _dct2_impl.1
$region0: #{_dct2_impl.1}
  #allocation0 [shape = 'u32[]', space=smem, size = 0x4, offset = 0x4, fixed_abs, tag = 'smem constant byte address 0x4 - core index']
  #allocation1 [shape = 'u32[72,128]{1,0:T(1,128)}', space=vmem, size = 0x9000, scoped, tag = 'internal scratch']
  #allocation2 [shape = 'f32[16,16]{1,0:T(8,128)}', space=vmem, size = 0x2000, scoped, tag = 'scratch operand']
  %s0 = inlined_call_operand.hbm [shape: f32[8,16,16], index: 0, kind: input, shape index: {}]
  %s1 = inlined_call_operand.hbm [shape: f32[16,16], index: 1, kind: input, shape index: {}]
  %s2 = inlined_call_operand.hbm [shape: f32[16,16], index: 2, kind: input, shape index: {}]
  %s3 = inlined_call_operand.hbm [shape: f32[8,16,16], index: 3, kind: output, shape index: {}]
  %s4 = sld [smem:[#allocation0]]
  $region57: #{_dct2_impl.1} parent=0
    _
  %s6 = ssub.s32 1, %s4
  %s7 = scalar_select 0, %s6, %s4
  $region1: #{_dct2_impl.1} parent=0
    #allocation3 [shape = 'u8[16384]{0}', space=vmem, size = 0x4000, scoped, tag = 'input window, operand 0']
    #allocation4 [shape = 's32[2]{0}', space=sflag, size = 0x8, scoped, tag = 'scoped memory for _dct2_impl.1']
    #allocation5 [shape = 's32[2]{0}', space=sflag, size = 0x8, scoped, tag = 'scoped memory for _dct2_impl.1']
    #allocation6 [shape = 'u8[8192]{0}', space=vmem, size = 0x2000, scoped, tag = 'input window, operand 1, single buffered']
    #allocation7 [shape = 's32[1]{0}', space=sflag, size = 0x4, scoped, tag = 'scoped memory for _dct2_impl.1']
    #allocation8 [shape = 'u8[8192]{0}', space=vmem, size = 0x2000, scoped, tag = 'input window, operand 2, single buffered']
    #allocation9 [shape = 'u8[16384]{0}', space=vmem, size = 0x4000, scoped, tag = 'output window, operand 0']
    %8 = vsyncpa [#allocation4], 0
    %s9 = scalar_lea.sflag [#allocation4], 1
    %10 = vsyncpa %s9, 0
    %11 = vsyncpa [#allocation7], 0
    %12 = vsyncpa [#allocation5], 0
    %s13 = scalar_lea.sflag [#allocation5], 1
    %14 = vsyncpa %s13, 0
    loop: start=0, step=1, limit=10
    $region2: #{_dct2_impl.1} parent=1 // loop_pre_header
      _
    $region3: #{_dct2_impl.1} parent=1 // loop_header
      %s16 = sphi 0, %s20
      %p17 = scmp.ge.s32.totalorder %s16, 10
      %s23 = sphi 0, %s35
      %s24 = sphi 0, %s31
      %s25 = sphi 0, %s23
      %s26 = sphi 0, %s24
      %s27 = sphi 0, %s25
      %s28 = sphi 0, %s26
      %s38 = sphi 0, %s40
      %s41 = sphi 0, %s38
      %s42 = sphi 0, %s41
      %s58 = sphi 0, %s42
      %s62 = sphi 0, %s62
      %s64 = sphi 0, %s62
      %s65 = sphi 0, %s64
      %s79 = sphi 0, %s65
      %s85 = sphi 0, %s87
      %s88 = sphi 0, %s85
      %s89 = sphi 0, %s88
      %s105 = sphi 0, %s89
      %s113 = sphi 0, %s115
      %s116 = sphi 0, %s113
      %s117 = sphi 0, %s116
      %s133 = sphi 0, %s117
    $region4: #{_dct2_impl.1} parent=1 // loop_header_branch
      %19 = sbr.rel (%p17) target = $region8
    $region5: #{_dct2_impl.1} parent=1 // loop_body
      %s21 = ssub.s32 %s16, 1
      %s22 = ssub.s32 %s16, 2
      %s29 = sadd.s32 1, %s24
      %p30 = scmp.ge.s32.totalorder %s29, 1
      %s31 = scalar_select %p30, 0, %s29
      %s32 = sadd.s32 1, %s23
      %s33 = scalar_select %p30, %s32, %s23
      %p34 = scmp.ge.s32.totalorder %s33, 8
      %s35 = scalar_select %p34, 0, %s33
      %s36 = ssub.s32 %s23, %s35
      %p37 = scmp.eq.s32.totalorder %s36, 0
      %s39 = sadd.s32 %s38, 1
      %s40 = scalar_select %p37, %s38, %s39
      %p43 = pneg %p37
      %p44 = scmp.eq.s32.totalorder %s16, 7
      %p45 = por %p43, %p44
      %p46 = scmp.ne.s32.totalorder %s38, %s41
      %p47 = scmp.eq.s32.totalorder %s16, 0
      %p48 = por %p46, %p47
      %p49 = scmp.ne.s32.totalorder %s38, %s41
      %p50 = scmp.eq.s32.totalorder %s21, 7
      %p51 = por %p49, %p50
      %p52 = scmp.ne.s32.totalorder %s41, %s42
      %p53 = scmp.eq.s32.totalorder %s21, 0
      %p54 = por %p52, %p53
      %p55 = scmp.ne.s32.totalorder %s41, %s42
      %p56 = scmp.eq.s32.totalorder %s22, 7
      %p57 = por %p55, %p56
      %p59 = scmp.ne.s32.totalorder %s42, %s58
      %p60 = scmp.eq.s32.totalorder %s22, 0
      %p61 = por %p59, %p60
      %s63 = sadd.s32 %s62, 1
      %p66 = scmp.eq.s32.totalorder %s16, 7
      %p67 = scmp.ne.s32.totalorder %s62, %s64
      %p68 = scmp.eq.s32.totalorder %s16, 0
      %p69 = por %p67, %p68
      %p70 = scmp.ne.s32.totalorder %s62, %s64
      %p71 = scmp.eq.s32.totalorder %s21, 7
      %p72 = por %p70, %p71
      %p73 = scmp.ne.s32.totalorder %s64, %s65
      %p74 = scmp.eq.s32.totalorder %s21, 0
      %p75 = por %p73, %p74
      %p76 = scmp.ne.s32.totalorder %s64, %s65
      %p77 = scmp.eq.s32.totalorder %s22, 7
      %p78 = por %p76, %p77
      %p80 = scmp.ne.s32.totalorder %s65, %s79
      %p81 = scmp.eq.s32.totalorder %s22, 0
      %p82 = por %p80, %p81
      %s83 = ssub.s32 %s24, %s31
      %p84 = scmp.eq.s32.totalorder %s83, 0
      %s86 = sadd.s32 %s85, 1
      %s87 = scalar_select %p84, %s85, %s86
      %p90 = pneg %p84
      %p91 = scmp.eq.s32.totalorder %s16, 7
      %p92 = por %p90, %p91
      %p93 = scmp.ne.s32.totalorder %s85, %s88
      %p94 = scmp.eq.s32.totalorder %s16, 0
      %p95 = por %p93, %p94
      %p96 = scmp.ne.s32.totalorder %s85, %s88
      %p97 = scmp.eq.s32.totalorder %s21, 7
      %p98 = por %p96, %p97
      %p99 = scmp.ne.s32.totalorder %s88, %s89
      %p100 = scmp.eq.s32.totalorder %s21, 0
      %p101 = por %p99, %p100
      %p102 = scmp.ne.s32.totalorder %s88, %s89
      %p103 = scmp.eq.s32.totalorder %s22, 7
      %p104 = por %p102, %p103
      %p106 = scmp.ne.s32.totalorder %s89, %s105
      %p107 = scmp.eq.s32.totalorder %s22, 0
      %p108 = por %p106, %p107
      %s109 = ssub.s32 %s23, %s35
      %s110 = ssub.s32 %s24, %s31
      %s111 = sor.u32 %s109, %s110
      %p112 = scmp.eq.s32.totalorder %s111, 0
      %s114 = sadd.s32 %s113, 1
      %s115 = scalar_select %p112, %s113, %s114
      %p118 = pneg %p112
      %p119 = scmp.eq.s32.totalorder %s16, 7
      %p120 = por %p118, %p119
      %p121 = scmp.ne.s32.totalorder %s113, %s116
      %p122 = scmp.eq.s32.totalorder %s16, 0
      %p123 = por %p121, %p122
      %p124 = scmp.ne.s32.totalorder %s113, %s116
      %p125 = scmp.eq.s32.totalorder %s21, 7
      %p126 = por %p124, %p125
      %p127 = scmp.ne.s32.totalorder %s116, %s117
      %p128 = scmp.eq.s32.totalorder %s21, 0
      %p129 = por %p127, %p128
      %p130 = scmp.ne.s32.totalorder %s116, %s117
      %p131 = scmp.eq.s32.totalorder %s22, 7
      %p132 = por %p130, %p131
      %p134 = scmp.ne.s32.totalorder %s117, %s133
      %p135 = scmp.eq.s32.totalorder %s22, 0
      %p136 = por %p134, %p135
      %p137 = scmp.le.s32.totalorder 1, %s16
      %p138 = scmp.lt.s32.totalorder %s16, 9
      %p139 = pnand %p137, %p138
      %p140 = pneg %p139
      // Predicated region
      $region9: #{_dct2_impl.1} parent=5 // pred_check
        _
      $region10: #{_dct2_impl.1} parent=5 // pred_check_branch
        %142 = sbr.rel (%p139) target = $region12
      $region11: #{_dct2_impl.1} parent=5 // pred_region
        %s143 = ssub.s32 %s16, 1
        // Predicated region
        $region13: #{_dct2_impl.1} parent=11 // pred_check
          %p144 = pneg %p75
        $region14: #{_dct2_impl.1} parent=11 // pred_check_branch
          %146 = sbr.rel (%p144) target = $region16
        $region15: #{_dct2_impl.1} parent=11 // pred_region
          %148 = vsyncadd [#allocation7], 0
          %s149 = sshll.u32 %s1, 4
          %s150 = int_to_ptr.hbm [resolvable:$true] %s149
          %s151 = sshll.u32 [#allocation6], 4
          %s152 = int_to_ptr.vmem [resolvable:$true] %s151
          %157 = dma.hbm_to_vmem [thread:$0]  %s150, 256, %s152, [#allocation7], 128, 128, 8
        $region16: #{_dct2_impl.1} parent=11 // pred_fallthru
          _
        // Predicated region
        $region17: #{_dct2_impl.1} parent=11 // pred_check
          %p158 = pneg %p101
        $region18: #{_dct2_impl.1} parent=11 // pred_check_branch
          %160 = sbr.rel (%p158) target = $region20
        $region19: #{_dct2_impl.1} parent=11 // pred_region
          %162 = vsyncadd [#allocation7], 0
          %s163 = smul.addr %s26, 8
          %s164 = scalar_lea.hbm %s2, %s163
          %s165 = sshll.u32 %s164, 4
          %s166 = int_to_ptr.hbm [resolvable:$true] %s165
          %s167 = sshll.u32 [#allocation8], 4
          %s168 = int_to_ptr.vmem [resolvable:$true] %s167
          %173 = dma.hbm_to_vmem [thread:$0]  %s166, 256, %s168, [#allocation7], 128, 128, 8
        $region20: #{_dct2_impl.1} parent=11 // pred_fallthru
          _
      $region12: #{_dct2_impl.1} parent=5 // pred_fallthru
        _
      %p174 = scmp.lt.s32.totalorder %s16, 8
      // Predicated region
      $region21: #{_dct2_impl.1} parent=5 // pred_check
        %p175 = pneg %p174
      $region22: #{_dct2_impl.1} parent=5 // pred_check_branch
        %177 = sbr.rel (%p175) target = $region24
      $region23: #{_dct2_impl.1} parent=5 // pred_region
        // Predicated region
        $region25: #{_dct2_impl.1} parent=23 // pred_check
          %p178 = pneg %p48
        $region26: #{_dct2_impl.1} parent=23 // pred_check_branch
          %180 = sbr.rel (%p178) target = $region28
        $region27: #{_dct2_impl.1} parent=23 // pred_region
          %s181 = sand.u32 %s38, 1
          %s182 = scalar_lea.sflag [#allocation4], %s181
          %s183 = sand.u32 %s38, 1
          %s184 = smul.addr %s183, 16
          %s185 = scalar_lea.vmem [#allocation3], %s184
          %187 = vsyncadd %s182, 0
          %s188 = smul.addr %s23, 2
          %s189 = smul.addr %s188, 8
          %s190 = scalar_lea.hbm %s0, %s189
          %s191 = sshll.u32 %s190, 4
          %s192 = int_to_ptr.hbm [resolvable:$true] %s191
          %s193 = sshll.u32 %s185, 4
          %s194 = int_to_ptr.vmem [resolvable:$true] %s193
          %199 = dma.hbm_to_vmem [thread:$0]  %s192, 256, %s194, %s182, 128, 128, 8
        $region28: #{_dct2_impl.1} parent=23 // pred_fallthru
          _
      $region24: #{_dct2_impl.1} parent=5 // pred_fallthru
        _
      %p200 = scmp.le.s32.totalorder 1, %s16
      %p201 = scmp.lt.s32.totalorder %s16, 9
      %p202 = pnand %p200, %p201
      %p203 = pneg %p202
      // Predicated region
      $region29: #{_dct2_impl.1} parent=5 // pred_check
        _
      $region30: #{_dct2_impl.1} parent=5 // pred_check_branch
        %205 = sbr.rel (%p202) target = $region32
      $region31: #{_dct2_impl.1} parent=5 // pred_region
        %s206 = ssub.s32 %s16, 1
        %s207 = sand.u32 %s41, 1
        %s208 = scalar_lea.sflag [#allocation4], %s207
        %s209 = sand.u32 %s41, 1
        %s210 = smul.addr %s209, 16
        %s211 = scalar_lea.vmem [#allocation3], %s210
        // Predicated region
        $region33: #{_dct2_impl.1} parent=31 // pred_check
          %p212 = pneg %p54
        $region34: #{_dct2_impl.1} parent=31 // pred_check_branch
          %214 = sbr.rel (%p212) target = $region36
        $region35: #{_dct2_impl.1} parent=31 // pred_region
          %216 = dma.done %s208, 256
        $region36: #{_dct2_impl.1} parent=31 // pred_fallthru
          _
        // Predicated region
        $region37: #{_dct2_impl.1} parent=31 // pred_check
          %p217 = pneg %p75
        $region38: #{_dct2_impl.1} parent=31 // pred_check_branch
          %219 = sbr.rel (%p217) target = $region40
        $region39: #{_dct2_impl.1} parent=31 // pred_region
          %221 = dma.done [#allocation7], 256
        $region40: #{_dct2_impl.1} parent=31 // pred_fallthru
          _
        // Predicated region
        $region41: #{_dct2_impl.1} parent=31 // pred_check
          %p222 = pneg %p101
        $region42: #{_dct2_impl.1} parent=31 // pred_check_branch
          %224 = sbr.rel (%p222) target = $region44
        $region43: #{_dct2_impl.1} parent=31 // pred_region
          %226 = dma.done [#allocation7], 256
        $region44: #{_dct2_impl.1} parent=31 // pred_fallthru
          _
        %s227 = sand.u32 %s41, 1
        %s228 = scalar_lea.sflag [#allocation4], %s227
        %s229 = sand.u32 %s41, 1
        %s230 = smul.addr %s229, 16
        %s231 = scalar_lea.vmem [#allocation3], %s230
        %p232 = pneg %p54
        %p233 = pneg %p51
        %p234 = pneg %p75
        %p235 = pneg %p72
        %p236 = pneg %p101
        %p237 = pneg %p98
        %p238 = pneg %p129
        %p239 = pneg %p126
        %s240 = sand.u32 %s116, 1
        %s241 = scalar_lea.sflag [#allocation5], %s240
        %s242 = sand.u32 %s116, 1
        %s243 = smul.addr %s242, 16
        %s244 = scalar_lea.vmem [#allocation9], %s243
        %v245 = vld [vmem:[%s211] sm:$0xff]
        %v246 = vld [vmem:[%s211 + $0x8] sm:$0xff]
        %v247 = vld [vmem:[#allocation8] sm:$0xff]
        %v248 = vld [vmem:[#allocation8 + $0x8] sm:$0xff]
        %vm249 = vcmask 130048
        %v251 = vsel %vm249, %v245, 0
        %v254 = vsel %vm249, %v246, 0
        %256 = vmatpush.msra.mxu0 0.0
        %257 = vmatpush.msra.mxu0 0.0
        %258 = vmatpush.msra.mxu0 0.0
        %259 = vmatpush.msra.mxu0 0.0
        %260 = vmatpush.msra.mxu0 0.0
        %261 = vmatpush.msra.mxu0 0.0
        %262 = vmatpush.msra.mxu0 0.0
        %263 = vmatpush.msra.mxu0 0.0
        %264 = vmatpush.msra.mxu0 0.0
        %265 = vmatpush.msra.mxu0 0.0
        %266 = vmatpush.msra.mxu0 0.0
        %267 = vmatpush.msra.mxu0 0.0
        %268 = vmatpush.msra.mxu0 0.0
        %269 = vmatpush.msra.mxu0 0.0
        %270 = vmatpush.msra.mxu0 %v248
        %271 = vmatpush.msra.mxu0 %v247
        %272 = vmatmul.f32.gmra.mxu0 %v251
        %v273 = vpop.f32.mrf.mxu0
        %v274 = vadd.f32 0.0, %v273
        %275 = vmatmul.f32.gmra.mxu0 %v254
        %v276 = vpop.f32.mrf.mxu0
        %v277 = vadd.f32 0.0, %v276
        %278 = vdwg.mxu0
        %279 = vst.msk [vmem:[#allocation2] sm:$0xff] %vm249, %v274
        %280 = vst.msk [vmem:[#allocation2 + $0x8] sm:$0xff] %vm249, %v277
        %v281 = vld [vmem:[#allocation6] sm:$0xff]
        %v282 = vld [vmem:[#allocation6 + $0x8] sm:$0xff]
        %v283 = vld [vmem:[#allocation2] sm:$0xff]
        %v284 = vld [vmem:[#allocation2 + $0x8] sm:$0xff]
        %v286 = vsel %vm249, %v281, 0
        %v289 = vsel %vm249, %v282, 0
        %291 = vmatpush.msra.mxu0 0.0
        %292 = vmatpush.msra.mxu0 0.0
        %293 = vmatpush.msra.mxu0 0.0
        %294 = vmatpush.msra.mxu0 0.0
        %295 = vmatpush.msra.mxu0 0.0
        %296 = vmatpush.msra.mxu0 0.0
        %297 = vmatpush.msra.mxu0 0.0
        %298 = vmatpush.msra.mxu0 0.0
        %299 = vmatpush.msra.mxu0 0.0
        %300 = vmatpush.msra.mxu0 0.0
        %301 = vmatpush.msra.mxu0 0.0
        %302 = vmatpush.msra.mxu0 0.0
        %303 = vmatpush.msra.mxu0 0.0
        %304 = vmatpush.msra.mxu0 0.0
        %305 = vmatpush.msra.mxu0 %v284
        %306 = vmatpush.msra.mxu0 %v283
        %307 = vmatmul.f32.gmra.mxu0 %v286
        %v308 = vpop.f32.mrf.mxu0
        %v309 = vadd.f32 0.0, %v308
        %310 = vmatmul.f32.gmra.mxu0 %v289
        %v311 = vpop.f32.mrf.mxu0
        %v312 = vadd.f32 0.0, %v311
        %313 = vdwg.mxu0
        %314 = vst.msk [vmem:[%s244] sm:$0xff] %vm249, %v309
        %315 = vst.msk [vmem:[%s244 + $0x8] sm:$0xff] %vm249, %v312
        %s316 = sand.u32 %s116, 1
        %s317 = scalar_lea.sflag [#allocation5], %s316
        %s318 = sand.u32 %s116, 1
        %s319 = smul.addr %s318, 16
        %s320 = scalar_lea.vmem [#allocation9], %s319
        // Predicated region
        $region45: #{_dct2_impl.1} parent=31 // pred_check
          %p321 = pneg %p126
        $region46: #{_dct2_impl.1} parent=31 // pred_check_branch
          %323 = sbr.rel (%p321) target = $region48
        $region47: #{_dct2_impl.1} parent=31 // pred_region
          %325 = vsyncadd %s317, 0
          %s326 = smul.addr %s25, 2
          %s327 = sadd.s32 %s26, %s326
          %s328 = smul.addr %s327, 8
          %s329 = scalar_lea.hbm %s3, %s328
          %s330 = sshll.u32 %s320, 4
          %s331 = int_to_ptr.vmem [resolvable:$true] %s330
          %s332 = sshll.u32 %s329, 4
          %s333 = int_to_ptr.hbm [resolvable:$true] %s332
          %338 = dma.vmem_to_hbm [thread:$0]  %s331, 256, %s333, %s317, 128, 128, 8
        $region48: #{_dct2_impl.1} parent=31 // pred_fallthru
          _
      $region32: #{_dct2_impl.1} parent=5 // pred_fallthru
        _
      %p339 = scmp.le.s32.totalorder 2, %s16
      // Predicated region
      $region49: #{_dct2_impl.1} parent=5 // pred_check
        %p340 = pneg %p339
      $region50: #{_dct2_impl.1} parent=5 // pred_check_branch
        %342 = sbr.rel (%p340) target = $region52
      $region51: #{_dct2_impl.1} parent=5 // pred_region
        %s343 = ssub.s32 %s16, 2
        // Predicated region
        $region53: #{_dct2_impl.1} parent=51 // pred_check
          %p344 = pneg %p132
        $region54: #{_dct2_impl.1} parent=51 // pred_check_branch
          %346 = sbr.rel (%p344) target = $region56
        $region55: #{_dct2_impl.1} parent=51 // pred_region
          %s347 = sand.u32 %s117, 1
          %s348 = scalar_lea.sflag [#allocation5], %s347
          %s349 = sand.u32 %s117, 1
          %s350 = smul.addr %s349, 16
          %s351 = scalar_lea.vmem [#allocation9], %s350
          %353 = dma.done %s348, 256
        $region56: #{_dct2_impl.1} parent=51 // pred_fallthru
          _
      $region52: #{_dct2_impl.1} parent=5 // pred_fallthru
        _
    $region6: #{_dct2_impl.1} parent=1 // loop_footer
      %s20 = sadd.s32 1, %s16
    $region7: #{_dct2_impl.1} parent=1 // loop_footer_branch
      %15 = sbr.rel target = $region3
    $region8: #{_dct2_impl.1} parent=1 // loop_exit
      _
    %354 = vsyncpa [#allocation4], 1
    %s355 = scalar_lea.sflag [#allocation4], 1
    %356 = vsyncpa %s355, 1
    %357 = vsyncpa [#allocation7], 1
    %358 = vsyncpa [#allocation5], 1
    %s359 = scalar_lea.sflag [#allocation5], 1
    %360 = vsyncpa %s359, 1

</llo_original>
